<compile_context>
chip_gen: v7x
topology: tpu7x:2x2x1
jax: 0.10.0
libtpu: 0.0.40
codegen_flags: <defaults>
</compile_context>

<pallas_src>
import functools

import jax
import jax.numpy as jnp
from jax import lax
from jax.experimental import pallas as pl
from jax.experimental.pallas import tpu as pltpu


def _pick_block_batch(B, N, target_rows=256):
    """Batch-tile size: fill the MXU row dim, prefer >=2 grid steps (v7x 2 TCs)."""
    divisors = [d for d in range(1, B + 1) if B % d == 0]
    for d in divisors:                       # fills rows AND keeps 2+ grid steps
        if d * N >= target_rows and B // d >= 2:
            return d
    for d in divisors:                       # fills rows (single step if needed)
        if d * N >= target_rows:
            return d
    for d in reversed(divisors):             # rows unreachable: keep 2+ steps
        if B // d >= 2:
            return d
    return B


def _assign_attn_kernel(*refs, num_heads, scale, assign_eps, fused_kv):
    if fused_kv:
        q_ref, k_ref, wq_ref, wkv_ref, wp_ref, bp_ref, out_ref = refs
    else:
        q_ref, k_ref, v_ref, wq_ref, wk_ref, wv_ref, wp_ref, bp_ref, out_ref = refs

    bt, N, C = q_ref.shape
    S = k_ref.shape[1]
    H = num_heads
    hd = C // H
    f32 = jnp.float32
    bf16 = jnp.bfloat16

    # Flatten leading (batch, token) dims: layout-free, fills the MXU M dim.
    xq = q_ref[...].reshape(bt * N, C)                       # bf16
    xk = k_ref[...].reshape(bt * S, C)                       # bf16

    # Projections: bf16 operands, f32 accumulation.
    q = jnp.dot(xq, wq_ref[...], preferred_element_type=f32)          # (bt*N, C)
    if fused_kv:
        kv = jnp.dot(xk, wkv_ref[...], preferred_element_type=f32)    # (bt*S, 2C)
        k = kv[:, :C]
        v = kv[:, C:]
    else:
        xv = v_ref[...].reshape(bt * S, C)
        k = jnp.dot(xk, wk_ref[...], preferred_element_type=f32)
        v = jnp.dot(xv, wv_ref[...], preferred_element_type=f32)

    q3 = q.reshape(bt, N, C).astype(bf16)
    k3 = k.reshape(bt, S, C).astype(bf16)
    v3 = v.reshape(bt, S, C).astype(bf16)

    # Head-invariant one-hot row index grid (hoisted out of the head loop).
    row_ids = lax.broadcasted_iota(jnp.int32, (bt, N, S), 1)

    head_outs = []
    for h in range(H):                      # static unroll; H == 1 by default
        qs = q3 if H == 1 else q3[:, :, h * hd:(h + 1) * hd]
        ks = k3 if H == 1 else k3[:, :, h * hd:(h + 1) * hd]
        vs = v3 if H == 1 else v3[:, :, h * hd:(h + 1) * hd]

        # Batched q @ k^T with the transpose folded into the contraction.
        raw = lax.dot_general(
            qs, ks,
            dimension_numbers=(((2,), (2,)), ((0,), (0,))),
            preferred_element_type=f32) * scale              # (bt, N, S) f32

        # hard_softmax over dim=-2 (the query/group axis).  The straight-through
        # form y_hard - y_soft + y_soft equals y_hard up to ulps, so the softmax
        # is skipped in this eval-only forward; argmax(raw) == argmax(softmax).
        idx = jnp.argmax(raw, axis=1, keepdims=True)         # (bt, 1, S)
        attn = (row_ids == idx).astype(f32)                  # (bt, N, S)

        # sum_assign=False: normalize over the key axis with eps (EUP recip).
        denom = jnp.sum(attn, axis=-1, keepdims=True) + assign_eps
        attn = attn * pl.reciprocal(denom, approx=True)

        head_outs.append(lax.dot_general(
            attn.astype(bf16), vs,
            dimension_numbers=(((2,), (1,)), ((0,), (0,))),
            preferred_element_type=f32))                     # (bt, N, hd)

    out = head_outs[0] if H == 1 else jnp.concatenate(head_outs, axis=-1)

    # Output projection (Linear with bias, bias added in f32).
    out2 = jnp.dot(out.reshape(bt * N, C).astype(bf16), wp_ref[...],
                   preferred_element_type=f32)
    out2 = out2 + bp_ref[...]                                # (1, C) broadcast
    out_ref[...] = out2.reshape(bt, N, C).astype(out_ref.dtype)


def assign_attention(query, key=None, value=None, params=None, *, num_heads=1,
                     qk_scale=None, assign_eps=1.0):
    """Pallas implementation of AssignAttention.forward (eval, return_attn=False)."""
    if key is None:
        key = query
    if value is None:
        value = key       # module default: value = key (= query if key is None)

    B, N, C = query.shape
    S = key.shape[1]
    assert C % num_heads == 0
    head_dim = C // num_heads
    scale = float(qk_scale) if qk_scale is not None else head_dim ** (-0.5)

    wq, wk, wv, wp, bp = params
    fused_kv = value is key                 # fuse K/V projection when they share input
    bt = _pick_block_batch(B, N)

    bf16 = jnp.bfloat16
    qx = query.astype(bf16)
    kx = key.astype(bf16)
    wq_b = wq.astype(bf16)
    wp_b = wp.astype(bf16)
    bp2 = bp.reshape(1, C).astype(jnp.float32)

    kernel = functools.partial(_assign_attn_kernel, num_heads=num_heads,
                               scale=scale, assign_eps=assign_eps,
                               fused_kv=fused_kv)

    q_spec = pl.BlockSpec((bt, N, C), lambda b: (b, 0, 0))
    k_spec = pl.BlockSpec((bt, S, C), lambda b: (b, 0, 0))
    w_spec = pl.BlockSpec((C, C), lambda b: (0, 0))
    b_spec = pl.BlockSpec((1, C), lambda b: (0, 0))

    if fused_kv:
        wkv_b = jnp.concatenate([wk, wv], axis=1).astype(bf16)       # (C, 2C)
        in_specs = [q_spec, k_spec, w_spec,
                    pl.BlockSpec((C, 2 * C), lambda b: (0, 0)), w_spec, b_spec]
        operands = (qx, kx, wq_b, wkv_b, wp_b, bp2)
    else:
        v_spec = pl.BlockSpec((bt, S, C), lambda b: (b, 0, 0))
        in_specs = [q_spec, k_spec, v_spec,
                    w_spec, w_spec, w_spec, w_spec, b_spec]
        operands = (qx, kx, value.astype(bf16), wq_b,
                    wk.astype(bf16), wv.astype(bf16), wp_b, bp2)

    out = pl.pallas_call(
        kernel,
        out_shape=jax.ShapeDtypeStruct((B, N, C), query.dtype),
        grid_spec=pltpu.PrefetchScalarGridSpec(
            num_scalar_prefetch=0,
            grid=(B // bt,),
            in_specs=in_specs,
            out_specs=pl.BlockSpec((bt, N, C), lambda b: (b, 0, 0)),
        ),
        compiler_params=pltpu.CompilerParams(
            dimension_semantics=("parallel",)),
    )(*operands)

    attn_dict = None  # return_attn=False path
    return out, attn_dict


def _reference(query, key, value, params, num_heads, scale, assign_eps):
    """Plain-JAX reference mirroring the torch module (eval, hard=True) with the
    same bf16-operand / f32-accumulation matmul casts as the kernel."""
    wq, wk, wv, wp, bp = params
    bf = jnp.bfloat16
    B, N, C = query.shape
    hd = C // num_heads

    def proj(x, w):
        y = jnp.dot(x.reshape(-1, C).astype(bf), w.astype(bf),
                    preferred_element_type=jnp.float32)
        return y.reshape(x.shape[0], -1, C)

    def split(x):
        return x.reshape(B, -1, num_heads, hd).transpose(0, 2, 1, 3)

    qh = split(proj(query, wq))
    kh = split(proj(key, wk))
    vh = split(proj(value, wv))

    raw = jnp.einsum('bhnd,bhsd->bhns', qh.astype(bf), kh.astype(bf),
                     preferred_element_type=jnp.float32) * scale
    y_soft = jax.nn.softmax(raw, axis=-2)
    idx = jnp.argmax(raw, axis=-2, keepdims=True)
    rows = lax.broadcasted_iota(jnp.int32, raw.shape, 2)
    y_hard = (rows == idx).astype(jnp.float32)
    attn = y_hard - y_soft + y_soft
    attn = attn / (attn.sum(-1, keepdims=True) + assign_eps)
    out = jnp.einsum('bhns,bhsd->bhnd', attn.astype(bf), vh.astype(bf),
                     preferred_element_type=jnp.float32)
    out = out.transpose(0, 2, 1, 3).reshape(B, N, C)
    out = jnp.dot(out.reshape(-1, C).astype(bf), wp.astype(bf),
                  preferred_element_type=jnp.float32).reshape(B, N, C)
    return out + bp[None, None, :]


if __name__ == "__main__":
    B, N, S, C = 2, 8, 8, 32
    num_heads = 1
    assign_eps = 1.0
    scale = (C // num_heads) ** (-0.5)

    key0 = jax.random.PRNGKey(0)
    kq, kk, kwq, kwk, kwv, kwp, kbp = jax.random.split(key0, 7)

    query = jax.random.normal(kq, (B, N, C), dtype=jnp.float32)
    key_t = jax.random.normal(kk, (B, S, C), dtype=jnp.float32)
    # value defaults to key inside assign_attention (module default behaviour).
    # TODO(synk): a distinct `value` tensor takes the non-fused Wk/Wv code path.

    wq = 0.05 * jax.random.normal(kwq, (C, C), dtype=jnp.float32)
    wk = 0.05 * jax.random.normal(kwk, (C, C), dtype=jnp.float32)
    wv = 0.05 * jax.random.normal(kwv, (C, C), dtype=jnp.float32)
    wp = 0.05 * jax.random.normal(kwp, (C, C), dtype=jnp.float32)
    bp = 0.01 * jax.random.normal(kbp, (C,), dtype=jnp.float32)
    params = (wq, wk, wv, wp, bp)

    out, attn_dict = assign_attention(query, key_t, params=params,
                                      num_heads=num_heads, assign_eps=assign_eps)
    out = jax.block_until_ready(out)

    ref = _reference(query, key_t, key_t, params, num_heads, scale, assign_eps)
    assert out.shape == (B, N, C)
    assert attn_dict is None
    max_err = float(jnp.max(jnp.abs(out - ref)))
    assert jnp.allclose(out, ref, atol=1e-2, rtol=1e-2), f"mismatch vs reference: {max_err}"

    print("KERNEL_OK")
</pallas_src>

<mosaic_0001>
module attributes {stable_mosaic.version = 11 : i64} {
  func.func @_assign_attn_kernel(%arg0: i32, %arg1: memref<1x8x32xbf16, #tpu.memory_space<vmem>>, %arg2: memref<1x8x32xbf16, #tpu.memory_space<vmem>>, %arg3: memref<32x32xbf16, #tpu.memory_space<vmem>>, %arg4: memref<32x64xbf16, #tpu.memory_space<vmem>>, %arg5: memref<32x32xbf16, #tpu.memory_space<vmem>>, %arg6: memref<1x32xf32, #tpu.memory_space<vmem>>, %arg7: memref<1x8x32xf32, #tpu.memory_space<vmem>>) attributes {dimension_semantics = [#tpu.dimension_semantics<parallel>], iteration_bounds = array<i64: 2>, scalar_prefetch = 0 : i64, scratch_operands = 0 : i64, tpu.core_type = #tpu.core_type<tc>, window_params = [{transform_indices = @transform_0, window_bounds = array<i64: 1, 8, 32>}, {transform_indices = @transform_1, window_bounds = array<i64: 1, 8, 32>}, {pipeline_mode = #tpu.pipeline_mode<synchronous>, transform_indices = @transform_2, window_bounds = array<i64: 32, 32>}, {pipeline_mode = #tpu.pipeline_mode<synchronous>, transform_indices = @transform_3, window_bounds = array<i64: 32, 64>}, {pipeline_mode = #tpu.pipeline_mode<synchronous>, transform_indices = @transform_4, window_bounds = array<i64: 32, 32>}, {pipeline_mode = #tpu.pipeline_mode<synchronous>, transform_indices = @transform_5, window_bounds = array<i64: 1, 32>}, {transform_indices = @transform_6, window_bounds = array<i64: 1, 8, 32>}]} {
    %c0 = arith.constant 0 : index
    %c0_0 = arith.constant 0 : index
    %c0_1 = arith.constant 0 : index
    %0 = vector.load %arg1[%c0, %c0_0, %c0_1] : memref<1x8x32xbf16, #tpu.memory_space<vmem>>, vector<1x8x32xbf16>
    %1 = vector.shape_cast %0 : vector<1x8x32xbf16> to vector<8x32xbf16>
    %c0_2 = arith.constant 0 : index
    %c0_3 = arith.constant 0 : index
    %c0_4 = arith.constant 0 : index
    %2 = vector.load %arg2[%c0_2, %c0_3, %c0_4] : memref<1x8x32xbf16, #tpu.memory_space<vmem>>, vector<1x8x32xbf16>
    %3 = vector.shape_cast %2 : vector<1x8x32xbf16> to vector<8x32xbf16>
    %c0_5 = arith.constant 0 : index
    %c0_6 = arith.constant 0 : index
    %4 = vector.load %arg3[%c0_5, %c0_6] : memref<32x32xbf16, #tpu.memory_space<vmem>>, vector<32x32xbf16>
    %cst = arith.constant dense<0.000000e+00> : vector<8x32xf32>
    %5 = tpu.matmul %1, %4, %cst {dimension_numbers = #tpu.dot_dimension_numbers<[1], [0], [0], [1], [0, 0, 1, 1], [], []>} : vector<8x32xbf16>, vector<32x32xbf16>, vector<8x32xf32> -> vector<8x32xf32>
    %c0_7 = arith.constant 0 : index
    %c0_8 = arith.constant 0 : index
    %6 = vector.load %arg4[%c0_7, %c0_8] : memref<32x64xbf16, #tpu.memory_space<vmem>>, vector<32x64xbf16>
    %cst_9 = arith.constant dense<0.000000e+00> : vector<8x64xf32>
    %7 = tpu.matmul %3, %6, %cst_9 {dimension_numbers = #tpu.dot_dimension_numbers<[1], [0], [0], [1], [0, 0, 1, 1], [], []>} : vector<8x32xbf16>, vector<32x64xbf16>, vector<8x64xf32> -> vector<8x64xf32>
    %8 = vector.extract_strided_slice %7 {offsets = [0, 0], sizes = [8, 32], strides = [1, 1]} : vector<8x64xf32> to vector<8x32xf32>
    %9 = vector.extract_strided_slice %7 {offsets = [0, 32], sizes = [8, 32], strides = [1, 1]} : vector<8x64xf32> to vector<8x32xf32>
    %10 = vector.shape_cast %5 : vector<8x32xf32> to vector<1x8x32xf32>
    %11 = arith.truncf %10 : vector<1x8x32xf32> to vector<1x8x32xbf16>
    %12 = vector.shape_cast %8 : vector<8x32xf32> to vector<1x8x32xf32>
    %13 = arith.truncf %12 : vector<1x8x32xf32> to vector<1x8x32xbf16>
    %14 = vector.shape_cast %9 : vector<8x32xf32> to vector<1x8x32xf32>
    %15 = arith.truncf %14 : vector<1x8x32xf32> to vector<1x8x32xbf16>
    %16 = tpu.iota {dimensions = array<i32: 1>} : vector<1x8x8xi32>
    %cst_10 = arith.constant dense<0.000000e+00> : vector<1x8x8xf32>
    %17 = tpu.matmul %11, %13, %cst_10 {dimension_numbers = #tpu.dot_dimension_numbers<[2], [2], [1], [1], [0, 0, 0, 1, 1, 1], [0], [0]>} : vector<1x8x32xbf16>, vector<1x8x32xbf16>, vector<1x8x8xf32> -> vector<1x8x8xf32>
    %cst_11 = arith.constant 0.176776692 : f32
    %18 = vector.broadcast %cst_11 : f32 to vector<1x8x8xf32>
    %19 = arith.mulf %17, %18 : vector<1x8x8xf32>
    %20 = tpu.reduce_index %19 {axis = 1 : i32, kind = #tpu.reduction_kind<arg_max>} : vector<1x8x8xf32> -> vector<1x8xi32>
    %21 = vector.shape_cast %20 : vector<1x8xi32> to vector<1x1x8xi32>
    %22 = vector.broadcast %21 : vector<1x1x8xi32> to vector<1x8x8xi32>
    %23 = arith.cmpi eq, %16, %22 : vector<1x8x8xi32>
    %24 = arith.extui %23 : vector<1x8x8xi1> to vector<1x8x8xi32>
    %25 = arith.sitofp %24 : vector<1x8x8xi32> to vector<1x8x8xf32>
    %cst_12 = arith.constant dense<0.000000e+00> : vector<1x8xf32>
    %26 = vector.multi_reduction <add>, %25, %cst_12 [2] : vector<1x8x8xf32> to vector<1x8xf32>
    %27 = vector.shape_cast %26 : vector<1x8xf32> to vector<1x8x1xf32>
    %cst_13 = arith.constant 1.000000e+00 : f32
    %28 = vector.broadcast %cst_13 : f32 to vector<1x8x1xf32>
    %29 = arith.addf %27, %28 : vector<1x8x1xf32>
    %30 = tpu.reciprocal %29 {approx = true} : vector<1x8x1xf32> -> vector<1x8x1xf32>
    %31 = vector.broadcast %30 : vector<1x8x1xf32> to vector<1x8x8xf32>
    %32 = arith.mulf %25, %31 : vector<1x8x8xf32>
    %33 = arith.truncf %32 : vector<1x8x8xf32> to vector<1x8x8xbf16>
    %cst_14 = arith.constant dense<0.000000e+00> : vector<1x8x32xf32>
    %34 = tpu.matmul %33, %15, %cst_14 {dimension_numbers = #tpu.dot_dimension_numbers<[2], [1], [1], [2], [0, 0, 0, 1, 1, 2], [0], [0]>} : vector<1x8x8xbf16>, vector<1x8x32xbf16>, vector<1x8x32xf32> -> vector<1x8x32xf32>
    %35 = vector.shape_cast %34 : vector<1x8x32xf32> to vector<8x32xf32>
    %36 = arith.truncf %35 : vector<8x32xf32> to vector<8x32xbf16>
    %c0_15 = arith.constant 0 : index
    %c0_16 = arith.constant 0 : index
    %37 = vector.load %arg5[%c0_15, %c0_16] : memref<32x32xbf16, #tpu.memory_space<vmem>>, vector<32x32xbf16>
    %cst_17 = arith.constant dense<0.000000e+00> : vector<8x32xf32>
    %38 = tpu.matmul %36, %37, %cst_17 {dimension_numbers = #tpu.dot_dimension_numbers<[1], [0], [0], [1], [0, 0, 1, 1], [], []>} : vector<8x32xbf16>, vector<32x32xbf16>, vector<8x32xf32> -> vector<8x32xf32>
    %c0_18 = arith.constant 0 : index
    %c0_19 = arith.constant 0 : index
    %39 = vector.load %arg6[%c0_18, %c0_19] : memref<1x32xf32, #tpu.memory_space<vmem>>, vector<1x32xf32>
    %40 = vector.broadcast %39 : vector<1x32xf32> to vector<8x32xf32>
    %41 = arith.addf %38, %40 : vector<8x32xf32>
    %42 = vector.shape_cast %41 : vector<8x32xf32> to vector<1x8x32xf32>
    %c0_20 = arith.constant 0 : index
    %c0_21 = arith.constant 0 : index
    %c0_22 = arith.constant 0 : index
    %43 = vector.load %arg7[%c0_20, %c0_21, %c0_22] : memref<1x8x32xf32, #tpu.memory_space<vmem>>, vector<1x8x32xf32>
    tpu.vector_store %arg7[%c0_20, %c0_21, %c0_22], %42 {strides = array<i32>} : memref<1x8x32xf32, #tpu.memory_space<vmem>>, vector<1x8x32xf32>,
    return
  }
  func.func @transform_0(%arg0: i32) -> (i32, i32, i32) {
    %c0_i32 = arith.constant 0 : i32
    %c0_i32_0 = arith.constant 0 : i32
    %c0_i32_1 = arith.constant 0 : i32
    return %arg0, %c0_i32, %c0_i32_0 : i32, i32, i32
  }
  func.func @transform_1(%arg0: i32) -> (i32, i32, i32) {
    %c0_i32 = arith.constant 0 : i32
    %c0_i32_0 = arith.constant 0 : i32
    %c0_i32_1 = arith.constant 0 : i32
    return %arg0, %c0_i32, %c0_i32_0 : i32, i32, i32
  }
  func.func @transform_2(%arg0: i32) -> (i32, i32) {
    %c0_i32 = arith.constant 0 : i32
    %c0_i32_0 = arith.constant 0 : i32
    %c0_i32_1 = arith.constant 0 : i32
    return %c0_i32, %c0_i32_0 : i32, i32
  }
  func.func @transform_3(%arg0: i32) -> (i32, i32) {
    %c0_i32 = arith.constant 0 : i32
    %c0_i32_0 = arith.constant 0 : i32
    %c0_i32_1 = arith.constant 0 : i32
    return %c0_i32, %c0_i32_0 : i32, i32
  }
  func.func @transform_4(%arg0: i32) -> (i32, i32) {
    %c0_i32 = arith.constant 0 : i32
    %c0_i32_0 = arith.constant 0 : i32
    %c0_i32_1 = arith.constant 0 : i32
    return %c0_i32, %c0_i32_0 : i32, i32
  }
  func.func @transform_5(%arg0: i32) -> (i32, i32) {
    %c0_i32 = arith.constant 0 : i32
    %c0_i32_0 = arith.constant 0 : i32
    %c0_i32_1 = arith.constant 0 : i32
    return %c0_i32, %c0_i32_0 : i32, i32
  }
  func.func @transform_6(%arg0: i32) -> (i32, i32, i32) {
    %c0_i32 = arith.constant 0 : i32
    %c0_i32_0 = arith.constant 0 : i32
    %c0_i32_1 = arith.constant 0 : i32
    return %arg0, %c0_i32, %c0_i32_0 : i32, i32, i32
  }
}

</mosaic_0001>

<llo_original>
// kernel: tpu_custom_call.1
$region0: #{tpu_custom_call.1}
  #allocation0 [shape = 'u32[]', space=smem, size = 0x4, offset = 0x4, fixed_abs, tag = 'smem constant byte address 0x4 - core index']
  #allocation1 [shape = 'u32[144,128]{1,0:T(1,128)}', space=vmem, size = 0x12000, scoped, tag = 'internal scratch']
  %s0 = inlined_call_operand.hbm [shape: bf16[2,8,32], index: 0, kind: input, shape index: {}]
  %s1 = inlined_call_operand.hbm [shape: bf16[2,8,32], index: 1, kind: input, shape index: {}]
  %s2 = inlined_call_operand.hbm [shape: bf16[32,32], index: 2, kind: input, shape index: {}]
  %s3 = inlined_call_operand.hbm [shape: bf16[32,64], index: 3, kind: input, shape index: {}]
  %s4 = inlined_call_operand.hbm [shape: bf16[32,32], index: 4, kind: input, shape index: {}]
  %s5 = inlined_call_operand.vmem [shape: f32[1,32], index: 5, kind: input, shape index: {}]
  %s6 = inlined_call_operand.hbm [shape: f32[2,8,32], index: 6, kind: output, shape index: {}]
  %s7 = sld [smem:[#allocation0]]
  $region77: #{tpu_custom_call.1} parent=0
    _
  %s9 = ssub.s32 1, %s7
  %s10 = scalar_select 0, %s9, %s7
  $region1: #{tpu_custom_call.1} parent=0
    #allocation2 [shape = 'u8[4096]{0}', space=vmem, size = 0x1000, scoped, tag = 'input window, operand 0']
    #allocation3 [shape = 's32[2]{0}', space=sflag, size = 0x8, scoped, tag = 'scoped memory for tpu_custom_call.1']
    #allocation4 [shape = 's32[2]{0}', space=sflag, size = 0x8, scoped, tag = 'scoped memory for tpu_custom_call.1']
    #allocation5 [shape = 'u8[4096]{0}', space=vmem, size = 0x1000, scoped, tag = 'input window, operand 1']
    #allocation6 [shape = 's32[2]{0}', space=sflag, size = 0x8, scoped, tag = 'scoped memory for tpu_custom_call.1']
    #allocation7 [shape = 'u8[8192]{0}', space=vmem, size = 0x2000, scoped, tag = 'input window, operand 2, single buffered']
    #allocation8 [shape = 'u8[8192]{0}', space=vmem, size = 0x2000, scoped, tag = 'input window, operand 3, single buffered']
    #allocation9 [shape = 's32[1]{0}', space=sflag, size = 0x4, scoped, tag = 'scoped memory for tpu_custom_call.1']
    #allocation10 [shape = 'u8[8192]{0}', space=vmem, size = 0x2000, scoped, tag = 'input window, operand 4, single buffered']
    #allocation11 [shape = 'u8[8192]{0}', space=vmem, size = 0x2000, scoped, tag = 'output window, operand 0']
    %11 = vsyncpa [#allocation3], 0
    %s12 = scalar_lea.sflag [#allocation3], 1
    %13 = vsyncpa %s12, 0
    %14 = vsyncpa [#allocation6], 0
    %s15 = scalar_lea.sflag [#allocation6], 1
    %16 = vsyncpa %s15, 0
    %17 = vsyncpa [#allocation9], 0
    %18 = vsyncpa [#allocation4], 0
    %s19 = scalar_lea.sflag [#allocation4], 1
    %20 = vsyncpa %s19, 0
    loop: start=0, step=1, limit=4
    $region2: #{tpu_custom_call.1} parent=1 // loop_pre_header
      _
    $region3: #{tpu_custom_call.1} parent=1 // loop_header
      %s22 = sphi 0, %s26
      %p23 = scmp.ge.s32.totalorder %s22, 4
      %s32 = sphi 0, %s34
      %s35 = sphi 0, %s32
      %s36 = sphi 0, %s35
      %s52 = sphi 0, %s36
      %s58 = sphi 0, %s60
      %s61 = sphi 0, %s58
      %s62 = sphi 0, %s61
      %s78 = sphi 0, %s62
      %s82 = sphi 0, %s82
      %s84 = sphi 0, %s82
      %s85 = sphi 0, %s84
      %s99 = sphi 0, %s85
      %s103 = sphi 0, %s103
      %s105 = sphi 0, %s103
      %s106 = sphi 0, %s105
      %s120 = sphi 0, %s106
      %s124 = sphi 0, %s124
      %s126 = sphi 0, %s124
      %s127 = sphi 0, %s126
      %s141 = sphi 0, %s127
      %s145 = sphi 0, %s145
      %s147 = sphi 0, %s145
      %s148 = sphi 0, %s147
      %s162 = sphi 0, %s148
      %s168 = sphi 0, %s170
      %s171 = sphi 0, %s168
      %s172 = sphi 0, %s171
      %s188 = sphi 0, %s172
    $region4: #{tpu_custom_call.1} parent=1 // loop_header_branch
      %25 = sbr.rel (%p23) target = $region8
    $region5: #{tpu_custom_call.1} parent=1 // loop_body
      %s27 = ssub.s32 %s22, 1
      %s28 = ssub.s32 %s22, 2
      %s29 = sadd.s32 %s22, 1
      %s30 = ssub.s32 %s22, %s29
      %p31 = scmp.eq.s32.totalorder %s30, 0
      %s33 = sadd.s32 %s32, 1
      %s34 = scalar_select %p31, %s32, %s33
      %p37 = pneg %p31
      %p38 = scmp.eq.s32.totalorder %s22, 1
      %p39 = por %p37, %p38
      %p40 = scmp.ne.s32.totalorder %s32, %s35
      %p41 = scmp.eq.s32.totalorder %s22, 0
      %p42 = por %p40, %p41
      %p43 = scmp.ne.s32.totalorder %s32, %s35
      %p44 = scmp.eq.s32.totalorder %s27, 1
      %p45 = por %p43, %p44
      %p46 = scmp.ne.s32.totalorder %s35, %s36
      %p47 = scmp.eq.s32.totalorder %s27, 0
      %p48 = por %p46, %p47
      %p49 = scmp.ne.s32.totalorder %s35, %s36
      %p50 = scmp.eq.s32.totalorder %s28, 1
      %p51 = por %p49, %p50
      %p53 = scmp.ne.s32.totalorder %s36, %s52
      %p54 = scmp.eq.s32.totalorder %s28, 0
      %p55 = por %p53, %p54
      %s56 = ssub.s32 %s22, %s29
      %p57 = scmp.eq.s32.totalorder %s56, 0
      %s59 = sadd.s32 %s58, 1
      %s60 = scalar_select %p57, %s58, %s59
      %p63 = pneg %p57
      %p64 = scmp.eq.s32.totalorder %s22, 1
      %p65 = por %p63, %p64
      %p66 = scmp.ne.s32.totalorder %s58, %s61
      %p67 = scmp.eq.s32.totalorder %s22, 0
      %p68 = por %p66, %p67
      %p69 = scmp.ne.s32.totalorder %s58, %s61
      %p70 = scmp.eq.s32.totalorder %s27, 1
      %p71 = por %p69, %p70
      %p72 = scmp.ne.s32.totalorder %s61, %s62
      %p73 = scmp.eq.s32.totalorder %s27, 0
      %p74 = por %p72, %p73
      %p75 = scmp.ne.s32.totalorder %s61, %s62
      %p76 = scmp.eq.s32.totalorder %s28, 1
      %p77 = por %p75, %p76
      %p79 = scmp.ne.s32.totalorder %s62, %s78
      %p80 = scmp.eq.s32.totalorder %s28, 0
      %p81 = por %p79, %p80
      %s83 = sadd.s32 %s82, 1
      %p86 = scmp.eq.s32.totalorder %s22, 1
      %p87 = scmp.ne.s32.totalorder %s82, %s84
      %p88 = scmp.eq.s32.totalorder %s22, 0
      %p89 = por %p87, %p88
      %p90 = scmp.ne.s32.totalorder %s82, %s84
      %p91 = scmp.eq.s32.totalorder %s27, 1
      %p92 = por %p90, %p91
      %p93 = scmp.ne.s32.totalorder %s84, %s85
      %p94 = scmp.eq.s32.totalorder %s27, 0
      %p95 = por %p93, %p94
      %p96 = scmp.ne.s32.totalorder %s84, %s85
      %p97 = scmp.eq.s32.totalorder %s28, 1
      %p98 = por %p96, %p97
      %p100 = scmp.ne.s32.totalorder %s85, %s99
      %p101 = scmp.eq.s32.totalorder %s28, 0
      %p102 = por %p100, %p101
      %s104 = sadd.s32 %s103, 1
      %p107 = scmp.eq.s32.totalorder %s22, 1
      %p108 = scmp.ne.s32.totalorder %s103, %s105
      %p109 = scmp.eq.s32.totalorder %s22, 0
      %p110 = por %p108, %p109
      %p111 = scmp.ne.s32.totalorder %s103, %s105
      %p112 = scmp.eq.s32.totalorder %s27, 1
      %p113 = por %p111, %p112
      %p114 = scmp.ne.s32.totalorder %s105, %s106
      %p115 = scmp.eq.s32.totalorder %s27, 0
      %p116 = por %p114, %p115
      %p117 = scmp.ne.s32.totalorder %s105, %s106
      %p118 = scmp.eq.s32.totalorder %s28, 1
      %p119 = por %p117, %p118
      %p121 = scmp.ne.s32.totalorder %s106, %s120
      %p122 = scmp.eq.s32.totalorder %s28, 0
      %p123 = por %p121, %p122
      %s125 = sadd.s32 %s124, 1
      %p128 = scmp.eq.s32.totalorder %s22, 1
      %p129 = scmp.ne.s32.totalorder %s124, %s126
      %p130 = scmp.eq.s32.totalorder %s22, 0
      %p131 = por %p129, %p130
      %p132 = scmp.ne.s32.totalorder %s124, %s126
      %p133 = scmp.eq.s32.totalorder %s27, 1
      %p134 = por %p132, %p133
      %p135 = scmp.ne.s32.totalorder %s126, %s127
      %p136 = scmp.eq.s32.totalorder %s27, 0
      %p137 = por %p135, %p136
      %p138 = scmp.ne.s32.totalorder %s126, %s127
      %p139 = scmp.eq.s32.totalorder %s28, 1
      %p140 = por %p138, %p139
      %p142 = scmp.ne.s32.totalorder %s127, %s141
      %p143 = scmp.eq.s32.totalorder %s28, 0
      %p144 = por %p142, %p143
      %s146 = sadd.s32 %s145, 1
      %p149 = scmp.eq.s32.totalorder %s22, 1
      %p150 = scmp.ne.s32.totalorder %s145, %s147
      %p151 = scmp.eq.s32.totalorder %s22, 0
      %p152 = por %p150, %p151
      %p153 = scmp.ne.s32.totalorder %s145, %s147
      %p154 = scmp.eq.s32.totalorder %s27, 1
      %p155 = por %p153, %p154
      %p156 = scmp.ne.s32.totalorder %s147, %s148
      %p157 = scmp.eq.s32.totalorder %s27, 0
      %p158 = por %p156, %p157
      %p159 = scmp.ne.s32.totalorder %s147, %s148
      %p160 = scmp.eq.s32.totalorder %s28, 1
      %p161 = por %p159, %p160
      %p163 = scmp.ne.s32.totalorder %s148, %s162
      %p164 = scmp.eq.s32.totalorder %s28, 0
      %p165 = por %p163, %p164
      %s166 = ssub.s32 %s22, %s29
      %p167 = scmp.eq.s32.totalorder %s166, 0
      %s169 = sadd.s32 %s168, 1
      %s170 = scalar_select %p167, %s168, %s169
      %p173 = pneg %p167
      %p174 = scmp.eq.s32.totalorder %s22, 1
      %p175 = por %p173, %p174
      %p176 = scmp.ne.s32.totalorder %s168, %s171
      %p177 = scmp.eq.s32.totalorder %s22, 0
      %p178 = por %p176, %p177
      %p179 = scmp.ne.s32.totalorder %s168, %s171
      %p180 = scmp.eq.s32.totalorder %s27, 1
      %p181 = por %p179, %p180
      %p182 = scmp.ne.s32.totalorder %s171, %s172
      %p183 = scmp.eq.s32.totalorder %s27, 0
      %p184 = por %p182, %p183
      %p185 = scmp.ne.s32.totalorder %s171, %s172
      %p186 = scmp.eq.s32.totalorder %s28, 1
      %p187 = por %p185, %p186
      %p189 = scmp.ne.s32.totalorder %s172, %s188
      %p190 = scmp.eq.s32.totalorder %s28, 0
      %p191 = por %p189, %p190
      %p192 = scmp.le.s32.totalorder 1, %s22
      %p193 = scmp.lt.s32.totalorder %s22, 3
      %p194 = pnand %p192, %p193
      %p195 = pneg %p194
      // Predicated region
      $region9: #{tpu_custom_call.1} parent=5 // pred_check
        _
      $region10: #{tpu_custom_call.1} parent=5 // pred_check_branch
        %197 = sbr.rel (%p194) target = $region12
      $region11: #{tpu_custom_call.1} parent=5 // pred_region
        %s198 = ssub.s32 %s22, 1
        // Predicated region
        $region13: #{tpu_custom_call.1} parent=11 // pred_check
          %p199 = pneg %p95
        $region14: #{tpu_custom_call.1} parent=11 // pred_check_branch
          %201 = sbr.rel (%p199) target = $region16
        $region15: #{tpu_custom_call.1} parent=11 // pred_region
          %s203 = ssub.s32 256, 256
          %204 = vsyncadd [#allocation6], %s203
          %s205 = sshll.u32 [#allocation7], 4
          %s206 = int_to_ptr.vmem [resolvable:$true] %s205
          %211 = dma.hbm_to_vmem [thread:$0]  %s2, 256, %s206, [#allocation6], 64, 64, 4
        $region16: #{tpu_custom_call.1} parent=11 // pred_fallthru
          _
        // Predicated region
        $region17: #{tpu_custom_call.1} parent=11 // pred_check
          %p212 = pneg %p116
        $region18: #{tpu_custom_call.1} parent=11 // pred_check_branch
          %214 = sbr.rel (%p212) target = $region20
        $region19: #{tpu_custom_call.1} parent=11 // pred_region
          %s216 = ssub.s32 256, 256
          %217 = vsyncadd [#allocation9], %s216
          %s218 = sshll.u32 [#allocation8], 4
          %s219 = int_to_ptr.vmem [resolvable:$true] %s218
          %224 = dma.hbm_to_vmem [thread:$0]  %s3, 256, %s219, [#allocation9], 64, 64, 4
        $region20: #{tpu_custom_call.1} parent=11 // pred_fallthru
          _
        // Predicated region
        $region21: #{tpu_custom_call.1} parent=11 // pred_check
          %p225 = pneg %p137
        $region22: #{tpu_custom_call.1} parent=11 // pred_check_branch
          %227 = sbr.rel (%p225) target = $region24
        $region23: #{tpu_custom_call.1} parent=11 // pred_region
          %s229 = ssub.s32 256, 256
          %230 = vsyncadd [#allocation9], %s229
          %s231 = sshll.u32 [#allocation10], 4
          %s232 = int_to_ptr.vmem [resolvable:$true] %s231
          %237 = dma.hbm_to_vmem [thread:$0]  %s4, 256, %s232, [#allocation9], 64, 64, 4
        $region24: #{tpu_custom_call.1} parent=11 // pred_fallthru
          _
        // Predicated region
        $region25: #{tpu_custom_call.1} parent=11 // pred_check
          %p238 = pneg %p158
        $region26: #{tpu_custom_call.1} parent=11 // pred_check_branch
          %240 = sbr.rel (%p238) target = $region28
        $region27: #{tpu_custom_call.1} parent=11 // pred_region
          _
        $region28: #{tpu_custom_call.1} parent=11 // pred_fallthru
          _
      $region12: #{tpu_custom_call.1} parent=5 // pred_fallthru
        _
      %p241 = scmp.lt.s32.totalorder %s22, 2
      // Predicated region
      $region29: #{tpu_custom_call.1} parent=5 // pred_check
        %p242 = pneg %p241
      $region30: #{tpu_custom_call.1} parent=5 // pred_check_branch
        %244 = sbr.rel (%p242) target = $region32
      $region31: #{tpu_custom_call.1} parent=5 // pred_region
        // Predicated region
        $region33: #{tpu_custom_call.1} parent=31 // pred_check
          %p245 = pneg %p42
        $region34: #{tpu_custom_call.1} parent=31 // pred_check_branch
          %247 = sbr.rel (%p245) target = $region36
        $region35: #{tpu_custom_call.1} parent=31 // pred_region
          %s248 = sand.u32 %s32, 1
          %s249 = scalar_lea.sflag [#allocation3], %s248
          %s250 = sand.u32 %s32, 1
          %s251 = smul.addr %s250, 4
          %s252 = scalar_lea.vmem [#allocation2], %s251
          %s254 = ssub.s32 64, 64
          %255 = vsyncadd %s249, %s254
          %s256 = smul.addr %s22, 64
          %s257 = scalar_lea.hbm %s0, %s256
          %s259 = sshll.u32 %s252, 4
          %s260 = int_to_ptr.vmem [resolvable:$true] %s259
          %262 = dma.hbm_to_vmem [thread:$0]  %s257, 64, %s260, %s249
        $region36: #{tpu_custom_call.1} parent=31 // pred_fallthru
          _
        // Predicated region
        $region37: #{tpu_custom_call.1} parent=31 // pred_check
          %p263 = pneg %p68
        $region38: #{tpu_custom_call.1} parent=31 // pred_check_branch
          %265 = sbr.rel (%p263) target = $region40
        $region39: #{tpu_custom_call.1} parent=31 // pred_region
          %s266 = sand.u32 %s22, 1
          %s267 = scalar_lea.sflag [#allocation6], %s266
          %s268 = sand.u32 %s58, 1
          %s269 = smul.addr %s268, 4
          %s270 = scalar_lea.vmem [#allocation5], %s269
          %s272 = ssub.s32 64, 64
          %273 = vsyncadd %s267, %s272
          %s274 = smul.addr %s22, 64
          %s275 = scalar_lea.hbm %s1, %s274
          %s277 = sshll.u32 %s270, 4
          %s278 = int_to_ptr.vmem [resolvable:$true] %s277
          %280 = dma.hbm_to_vmem [thread:$0]  %s275, 64, %s278, %s267
        $region40: #{tpu_custom_call.1} parent=31 // pred_fallthru
          _
      $region32: #{tpu_custom_call.1} parent=5 // pred_fallthru
        _
      %p281 = scmp.le.s32.totalorder 1, %s22
      %p282 = scmp.lt.s32.totalorder %s22, 3
      %p283 = pnand %p281, %p282
      %p284 = pneg %p283
      // Predicated region
      $region41: #{tpu_custom_call.1} parent=5 // pred_check
        _
      $region42: #{tpu_custom_call.1} parent=5 // pred_check_branch
        %286 = sbr.rel (%p283) target = $region44
      $region43: #{tpu_custom_call.1} parent=5 // pred_region
        %s287 = ssub.s32 %s22, 1
        %s288 = sand.u32 %s35, 1
        %s289 = scalar_lea.sflag [#allocation3], %s288
        %s290 = sand.u32 %s35, 1
        %s291 = smul.addr %s290, 4
        %s292 = scalar_lea.vmem [#allocation2], %s291
        // Predicated region
        $region45: #{tpu_custom_call.1} parent=43 // pred_check
          %p293 = pneg %p48
        $region46: #{tpu_custom_call.1} parent=43 // pred_check_branch
          %295 = sbr.rel (%p293) target = $region48
        $region47: #{tpu_custom_call.1} parent=43 // pred_region
          %296 = dma.done %s289, 64
        $region48: #{tpu_custom_call.1} parent=43 // pred_fallthru
          _
        %s297 = sand.u32 %s27, 1
        %s298 = scalar_lea.sflag [#allocation6], %s297
        %s299 = sand.u32 %s61, 1
        %s300 = smul.addr %s299, 4
        %s301 = scalar_lea.vmem [#allocation5], %s300
        // Predicated region
        $region49: #{tpu_custom_call.1} parent=43 // pred_check
          %p302 = pneg %p74
        $region50: #{tpu_custom_call.1} parent=43 // pred_check_branch
          %304 = sbr.rel (%p302) target = $region52
        $region51: #{tpu_custom_call.1} parent=43 // pred_region
          %305 = dma.done %s298, 64
        $region52: #{tpu_custom_call.1} parent=43 // pred_fallthru
          _
        // Predicated region
        $region53: #{tpu_custom_call.1} parent=43 // pred_check
          %p306 = pneg %p95
        $region54: #{tpu_custom_call.1} parent=43 // pred_check_branch
          %308 = sbr.rel (%p306) target = $region56
        $region55: #{tpu_custom_call.1} parent=43 // pred_region
          %309 = dma.done [#allocation6], 256
        $region56: #{tpu_custom_call.1} parent=43 // pred_fallthru
          _
        // Predicated region
        $region57: #{tpu_custom_call.1} parent=43 // pred_check
          %p310 = pneg %p116
        $region58: #{tpu_custom_call.1} parent=43 // pred_check_branch
          %312 = sbr.rel (%p310) target = $region60
        $region59: #{tpu_custom_call.1} parent=43 // pred_region
          %313 = dma.done [#allocation9], 256
        $region60: #{tpu_custom_call.1} parent=43 // pred_fallthru
          _
        // Predicated region
        $region61: #{tpu_custom_call.1} parent=43 // pred_check
          %p314 = pneg %p137
        $region62: #{tpu_custom_call.1} parent=43 // pred_check_branch
          %316 = sbr.rel (%p314) target = $region64
        $region63: #{tpu_custom_call.1} parent=43 // pred_region
          %317 = dma.done [#allocation9], 256
        $region64: #{tpu_custom_call.1} parent=43 // pred_fallthru
          _
        %s318 = sand.u32 %s35, 1
        %s319 = scalar_lea.sflag [#allocation3], %s318
        %s320 = sand.u32 %s35, 1
        %s321 = smul.addr %s320, 4
        %s322 = scalar_lea.vmem [#allocation2], %s321
        %p323 = pneg %p48
        %p324 = pneg %p45
        %s325 = sand.u32 %s27, 1
        %s326 = scalar_lea.sflag [#allocation6], %s325
        %s327 = sand.u32 %s61, 1
        %s328 = smul.addr %s327, 4
        %s329 = scalar_lea.vmem [#allocation5], %s328
        %p330 = pneg %p74
        %p331 = pneg %p71
        %p332 = pneg %p95
        %p333 = pneg %p92
        %p334 = pneg %p116
        %p335 = pneg %p113
        %p336 = pneg %p137
        %p337 = pneg %p134
        %p338 = pneg %p158
        %p339 = pneg %p155
        %p340 = pneg %p184
        %p341 = pneg %p181
        %s342 = sand.u32 %s171, 1
        %s343 = scalar_lea.sflag [#allocation4], %s342
        %s344 = sand.u32 %s171, 1
        %s345 = smul.addr %s344, 8
        %s346 = scalar_lea.vmem [#allocation11], %s345
        %v348 = vld [vmem:[%s292] sm:$0xf]
        %v349 = vld [vmem:[%s301] sm:$0xf]
        %v350 = vld [vmem:[#allocation7] sm:$0xf]
        %v351 = vld [vmem:[#allocation7 + $0x4] sm:$0xf]
        %v352 = vld [vmem:[#allocation7 + $0x8] sm:$0xf]
        %v353 = vld [vmem:[#allocation7 + $0xc] sm:$0xf]
        %v358 = vunpack.c.l.b16 %v350
        %v359 = vunpack.c.l.b16 %v351
        %v360 = vunpack.c.l.b16 %v352
        %v361 = vunpack.c.l.b16 %v353
        %v362 = vpack.c.b16 %v359, %v358
        %v363 = vpack.c.b16 %v361, %v360
        %vm366 = vcmask 261120
        %v368 = vsel %vm366, %v348, 0
        %370 = vmatprep.subr.bf16.mxu0 0
        %371 = vmatpush1.bf16.msra.mxu0 %v362
        %372 = vmatprep.subr.bf16.mxu0 0
        %373 = vmatpush1.bf16.msra.mxu0 %v363
        %374 = vmatprep.subr.bf16.mxu0 0
        %375 = vmatpush1.bf16.msra.mxu0 0
        %376 = vmatprep.subr.bf16.mxu0 0
        %377 = vmatpush1.bf16.msra.mxu0 0
        %378 = vmatprep.subr.bf16.mxu0 0
        %379 = vmatpush1.bf16.msra.mxu0 0
        %380 = vmatprep.subr.bf16.mxu0 0
        %381 = vmatpush1.bf16.msra.mxu0 0
        %382 = vmatprep.subr.bf16.mxu0 0
        %383 = vmatpush1.bf16.msra.mxu0 0
        %384 = vmatprep.subr.bf16.mxu0 0
        %385 = vmatpush1.bf16.msra.mxu0 0
        %386 = vmatprep.subr.bf16.mxu0 0
        %387 = vmatpush1.bf16.msra.mxu0 0
        %388 = vmatprep.subr.bf16.mxu0 0
        %389 = vmatpush1.bf16.msra.mxu0 0
        %390 = vmatprep.subr.bf16.mxu0 0
        %391 = vmatpush1.bf16.msra.mxu0 0
        %392 = vmatprep.subr.bf16.mxu0 0
        %393 = vmatpush1.bf16.msra.mxu0 0
        %394 = vmatprep.subr.bf16.mxu0 0
        %395 = vmatpush1.bf16.msra.mxu0 0
        %396 = vmatprep.subr.bf16.mxu0 0
        %397 = vmatpush1.bf16.msra.mxu0 0
        %398 = vmatprep.subr.bf16.mxu0 0
        %399 = vmatpush1.bf16.msra.mxu0 0
        %400 = vmatprep.subr.bf16.mxu0 0
        %401 = vmatpush1.bf16.msra.mxu0 0
        %402 = vmatprep.mubr.bf16.mxu0 0
        %403 = vmatmul.mubr.bf16.gmra.mrb[0].mxu0 %v368
        %v404 = vpop.f32.mrb[0].mxu0
        %v405 = vadd.f32 0.0, %v404
        %v406 = vpop.f32.mrb[0].mxu0
        %v407 = vpop.f32.mrb[0].mxu0
        %v408 = vpop.f32.mrb[0].mxu0
        %409 = vdwg.mxu0
        %v410 = vld [vmem:[#allocation8] sm:$0xf]
        %v411 = vld [vmem:[#allocation8 + $0x4] sm:$0xf]
        %v412 = vld [vmem:[#allocation8 + $0x8] sm:$0xf]
        %v413 = vld [vmem:[#allocation8 + $0xc] sm:$0xf]
        %v418 = vunpack.c.l.b16 %v410
        %v419 = vunpack.c.l.b16 %v411
        %v420 = vunpack.c.l.b16 %v412
        %v421 = vunpack.c.l.b16 %v413
        %v422 = vpack.c.b16 %v419, %v418
        %v423 = vpack.c.b16 %v421, %v420
        %v427 = vsel %vm366, %v349, 0
        %429 = vmatprep.subr.bf16.mxu0 0
        %430 = vmatpush1.bf16.msra.mxu0 %v422
        %431 = vmatprep.subr.bf16.mxu0 0
        %432 = vmatpush1.bf16.msra.mxu0 %v423
        %433 = vmatprep.subr.bf16.mxu0 0
        %434 = vmatpush1.bf16.msra.mxu0 0
        %435 = vmatprep.subr.bf16.mxu0 0
        %436 = vmatpush1.bf16.msra.mxu0 0
        %437 = vmatprep.subr.bf16.mxu0 0
        %438 = vmatpush1.bf16.msra.mxu0 0
        %439 = vmatprep.subr.bf16.mxu0 0
        %440 = vmatpush1.bf16.msra.mxu0 0
        %441 = vmatprep.subr.bf16.mxu0 0
        %442 = vmatpush1.bf16.msra.mxu0 0
        %443 = vmatprep.subr.bf16.mxu0 0
        %444 = vmatpush1.bf16.msra.mxu0 0
        %445 = vmatprep.subr.bf16.mxu0 0
        %446 = vmatpush1.bf16.msra.mxu0 0
        %447 = vmatprep.subr.bf16.mxu0 0
        %448 = vmatpush1.bf16.msra.mxu0 0
        %449 = vmatprep.subr.bf16.mxu0 0
        %450 = vmatpush1.bf16.msra.mxu0 0
        %451 = vmatprep.subr.bf16.mxu0 0
        %452 = vmatpush1.bf16.msra.mxu0 0
        %453 = vmatprep.subr.bf16.mxu0 0
        %454 = vmatpush1.bf16.msra.mxu0 0
        %455 = vmatprep.subr.bf16.mxu0 0
        %456 = vmatpush1.bf16.msra.mxu0 0
        %457 = vmatprep.subr.bf16.mxu0 0
        %458 = vmatpush1.bf16.msra.mxu0 0
        %459 = vmatprep.subr.bf16.mxu0 0
        %460 = vmatpush1.bf16.msra.mxu0 0
        %461 = vmatprep.mubr.bf16.mxu0 0
        %462 = vmatmul.mubr.bf16.gmra.mrb[0].mxu0 %v427
        %v463 = vpop.f32.mrb[0].mxu0
        %v464 = vadd.f32 0.0, %v463
        %v465 = vpop.f32.mrb[0].mxu0
        %v466 = vpop.f32.mrb[0].mxu0
        %v467 = vpop.f32.mrb[0].mxu0
        %468 = vdwg.mxu0
        %v469 = vpack.c.bf16 %v405, %v405
        %v470 = vpack.c.bf16 %v464, %v464
        %v471 = vlaneseq
        %v472 = vshrl.u32 %v471, 7
        %v474 = vsel %vm366, %v469, 0
        %v477 = vsel %vm366, %v470, 0
        %479 = vmatprep.subr.bf16.mxu0 0
        %480 = vmatpush1.bf16.xpose.msra.mxu0 %v477
        %481 = vmatprep.subr.bf16.mxu0 0
        %482 = vmatpush1.bf16.xpose.msra.mxu0 0
        %483 = vmatprep.subr.bf16.mxu0 0
        %484 = vmatpush1.bf16.xpose.msra.mxu0 0
        %485 = vmatprep.subr.bf16.mxu0 0
        %486 = vmatpush1.bf16.xpose.msra.mxu0 0
        %487 = vmatprep.subr.bf16.mxu0 0
        %488 = vmatpush1.bf16.xpose.msra.mxu0 0
        %489 = vmatprep.subr.bf16.mxu0 0
        %490 = vmatpush1.bf16.xpose.msra.mxu0 0
        %491 = vmatprep.subr.bf16.mxu0 0
        %492 = vmatpush1.bf16.xpose.msra.mxu0 0
        %493 = vmatprep.subr.bf16.mxu0 0
        %494 = vmatpush1.bf16.xpose.msra.mxu0 0
        %495 = vmatprep.subr.bf16.mxu0 0
        %496 = vmatpush1.bf16.xpose.msra.mxu0 0
        %497 = vmatprep.subr.bf16.mxu0 0
        %498 = vmatpush1.bf16.xpose.msra.mxu0 0
        %499 = vmatprep.subr.bf16.mxu0 0
        %500 = vmatpush1.bf16.xpose.msra.mxu0 0
        %501 = vmatprep.subr.bf16.mxu0 0
        %502 = vmatpush1.bf16.xpose.msra.mxu0 0
        %503 = vmatprep.subr.bf16.mxu0 0
        %504 = vmatpush1.bf16.xpose.msra.mxu0 0
        %505 = vmatprep.subr.bf16.mxu0 0
        %506 = vmatpush1.bf16.xpose.msra.mxu0 0
        %507 = vmatprep.subr.bf16.mxu0 0
        %508 = vmatpush1.bf16.xpose.msra.mxu0 0
        %509 = vmatprep.subr.bf16.mxu0 0
        %510 = vmatpush1.bf16.xpose.msra.mxu0 0
        %511 = vmatprep.mubr.bf16.mxu0 0
        %512 = vmatmul.mubr.bf16.gmra.mrb[0].mxu0 %v474
        %v513 = vpop.f32.mrb[0].mxu0
        %v514 = vadd.f32 0.0, %v513
        %v515 = vpop.f32.mrb[0].mxu0
        %v516 = vpop.f32.mrb[0].mxu0
        %v517 = vpop.f32.mrb[0].mxu0
        %518 = vdwg.mxu0
        %v519 = vmul.f32 %v514, 0.17677669
        %vm520 = vcmask 64512
        %v521 = vsel %vm520, %v519, -inf
        %v522 = vrot.slane %v521, 4
        %v523 = vrot.slane %v472, 4
        %vm524 = vcmp.ge.f32.partialorder %v521, %v522
        %v525 = vsel %vm524, %v521, %v522
        %v526 = vsel %vm524, %v472, %v523
        %v527 = vrot.slane %v525, 6
        %v528 = vrot.slane %v526, 6
        %vm529 = vcmp.ge.f32.partialorder %v525, %v527
        %v530 = vsel %vm529, %v525, %v527
        %v531 = vsel %vm529, %v526, %v528
        %v532 = vrot.slane %v530, 7
        %v533 = vrot.slane %v531, 7
        %vm534 = vcmp.ge.f32.partialorder %v530, %v532
        %v535 = vsel %vm534, %v531, %v533
        %v536 = vlaneseq
        %v537 = vshrl.u32 %v536, 7
        %v538 = vsub.s32 0, %v537
        %v539 = vrot.slane %v535, %v538
        %vm540 = vcmp.eq.s32.totalorder %v472, %v539
        %v541 = vsel %vm540, 1, 0
        %v542 = vcvt.s32.f32 %v541
        %v543 = vsel %vm520, %v542, 0.0
        %544 = vadd.xlane.f32.xlu0 %v543
        %v545 = vpop.xlane.xlu0 %544
        %v546 = vadd.f32 %v545, 1.0
        %v547 = vrcp.pop %v546
        %v548 = vmul.f32 %v542, %v547
        %v549 = vpack.c.bf16 %v548, %v548
        %551 = vrot.lane.b32.xlu0 %v470, 96
        %v552 = vpop.permute.xlu0 %551
        %v554 = vsel %vm520, %v549, 0
        %vm556 = vcmask 1043456
        %v558 = vsel %vm556, %v552, 0
        %560 = vmatprep.subr.bf16.mxu0 0
        %561 = vmatpush1.bf16.msra.mxu0 %v558
        %562 = vmatprep.subr.bf16.mxu0 0
        %563 = vmatpush1.bf16.msra.mxu0 0
        %564 = vmatprep.subr.bf16.mxu0 0
        %565 = vmatpush1.bf16.msra.mxu0 0
        %566 = vmatprep.subr.bf16.mxu0 0
        %567 = vmatpush1.bf16.msra.mxu0 0
        %568 = vmatprep.subr.bf16.mxu0 0
        %569 = vmatpush1.bf16.msra.mxu0 0
        %570 = vmatprep.subr.bf16.mxu0 0
        %571 = vmatpush1.bf16.msra.mxu0 0
        %572 = vmatprep.subr.bf16.mxu0 0
        %573 = vmatpush1.bf16.msra.mxu0 0
        %574 = vmatprep.subr.bf16.mxu0 0
        %575 = vmatpush1.bf16.msra.mxu0 0
        %576 = vmatprep.subr.bf16.mxu0 0
        %577 = vmatpush1.bf16.msra.mxu0 0
        %578 = vmatprep.subr.bf16.mxu0 0
        %579 = vmatpush1.bf16.msra.mxu0 0
        %580 = vmatprep.subr.bf16.mxu0 0
        %581 = vmatpush1.bf16.msra.mxu0 0
        %582 = vmatprep.subr.bf16.mxu0 0
        %583 = vmatpush1.bf16.msra.mxu0 0
        %584 = vmatprep.subr.bf16.mxu0 0
        %585 = vmatpush1.bf16.msra.mxu0 0
        %586 = vmatprep.subr.bf16.mxu0 0
        %587 = vmatpush1.bf16.msra.mxu0 0
        %588 = vmatprep.subr.bf16.mxu0 0
        %589 = vmatpush1.bf16.msra.mxu0 0
        %590 = vmatprep.subr.bf16.mxu0 0
        %591 = vmatpush1.bf16.msra.mxu0 0
        %592 = vmatprep.mubr.bf16.mxu0 0
        %593 = vmatmul.mubr.bf16.gmra.mrb[0].mxu0 %v554
        %v594 = vpop.f32.mrb[0].mxu0
        %v595 = vadd.f32 0.0, %v594
        %v596 = vpop.f32.mrb[0].mxu0
        %v597 = vpop.f32.mrb[0].mxu0
        %v598 = vpop.f32.mrb[0].mxu0
        %599 = vdwg.mxu0
        %v600 = vpack.c.bf16 %v595, %v595
        %v601 = vld [vmem:[#allocation10] sm:$0xf]
        %v602 = vld [vmem:[#allocation10 + $0x4] sm:$0xf]
        %v603 = vld [vmem:[#allocation10 + $0x8] sm:$0xf]
        %v604 = vld [vmem:[#allocation10 + $0xc] sm:$0xf]
        %v605 = vld [vmem:[%s5] sm:$0x1]
        %v607 = vlaneseq
        %v608 = vshrl.u32 %v607, 7
        %v609 = vsub.s32 0, %v608
        %v610 = vrot.slane %v605, %v609
        %v616 = vunpack.c.l.b16 %v601
        %v617 = vunpack.c.l.b16 %v602
        %v618 = vunpack.c.l.b16 %v603
        %v619 = vunpack.c.l.b16 %v604
        %v620 = vpack.c.b16 %v617, %v616
        %v621 = vpack.c.b16 %v619, %v618
        %v625 = vsel %vm366, %v600, 0
        %627 = vmatprep.subr.bf16.mxu0 0
        %628 = vmatpush1.bf16.msra.mxu0 %v620
        %629 = vmatprep.subr.bf16.mxu0 0
        %630 = vmatpush1.bf16.msra.mxu0 %v621
        %631 = vmatprep.subr.bf16.mxu0 0
        %632 = vmatpush1.bf16.msra.mxu0 0
        %633 = vmatprep.subr.bf16.mxu0 0
        %634 = vmatpush1.bf16.msra.mxu0 0
        %635 = vmatprep.subr.bf16.mxu0 0
        %636 = vmatpush1.bf16.msra.mxu0 0
        %637 = vmatprep.subr.bf16.mxu0 0
        %638 = vmatpush1.bf16.msra.mxu0 0
        %639 = vmatprep.subr.bf16.mxu0 0
        %640 = vmatpush1.bf16.msra.mxu0 0
        %641 = vmatprep.subr.bf16.mxu0 0
        %642 = vmatpush1.bf16.msra.mxu0 0
        %643 = vmatprep.subr.bf16.mxu0 0
        %644 = vmatpush1.bf16.msra.mxu0 0
        %645 = vmatprep.subr.bf16.mxu0 0
        %646 = vmatpush1.bf16.msra.mxu0 0
        %647 = vmatprep.subr.bf16.mxu0 0
        %648 = vmatpush1.bf16.msra.mxu0 0
        %649 = vmatprep.subr.bf16.mxu0 0
        %650 = vmatpush1.bf16.msra.mxu0 0
        %651 = vmatprep.subr.bf16.mxu0 0
        %652 = vmatpush1.bf16.msra.mxu0 0
        %653 = vmatprep.subr.bf16.mxu0 0
        %654 = vmatpush1.bf16.msra.mxu0 0
        %655 = vmatprep.subr.bf16.mxu0 0
        %656 = vmatpush1.bf16.msra.mxu0 0
        %657 = vmatprep.subr.bf16.mxu0 0
        %658 = vmatpush1.bf16.msra.mxu0 0
        %659 = vmatprep.mubr.bf16.mxu0 0
        %660 = vmatmul.mubr.bf16.gmra.mrb[0].mxu0 %v625
        %v661 = vpop.f32.mrb[0].mxu0
        %v662 = vadd.f32 %v610, %v661
        %v663 = vpop.f32.mrb[0].mxu0
        %v664 = vpop.f32.mrb[0].mxu0
        %v665 = vpop.f32.mrb[0].mxu0
        %666 = vdwg.mxu0
        %667 = vst.msk [vmem:[%s346] sm:$0xff] %vm366, %v662
        %s668 = sand.u32 %s171, 1
        %s669 = scalar_lea.sflag [#allocation4], %s668
        %s670 = sand.u32 %s171, 1
        %s671 = smul.addr %s670, 8
        %s672 = scalar_lea.vmem [#allocation11], %s671
        // Predicated region
        $region65: #{tpu_custom_call.1} parent=43 // pred_check
          %p673 = pneg %p181
        $region66: #{tpu_custom_call.1} parent=43 // pred_check_branch
          %675 = sbr.rel (%p673) target = $region68
        $region67: #{tpu_custom_call.1} parent=43 // pred_region
          %s677 = ssub.s32 128, 128
          %678 = vsyncadd %s669, %s677
          %s679 = smul.addr %s27, 128
          %s680 = scalar_lea.hbm %s6, %s679
          %s682 = sshll.u32 %s672, 4
          %s683 = int_to_ptr.vmem [resolvable:$true] %s682
          %685 = dma.vmem_to_hbm [thread:$0]  %s683, 128, %s680, %s669
        $region68: #{tpu_custom_call.1} parent=43 // pred_fallthru
          _
      $region44: #{tpu_custom_call.1} parent=5 // pred_fallthru
        _
      %p686 = scmp.le.s32.totalorder 2, %s22
      // Predicated region
      $region69: #{tpu_custom_call.1} parent=5 // pred_check
        %p687 = pneg %p686
      $region70: #{tpu_custom_call.1} parent=5 // pred_check_branch
        %689 = sbr.rel (%p687) target = $region72
      $region71: #{tpu_custom_call.1} parent=5 // pred_region
        %s690 = ssub.s32 %s22, 2
        // Predicated region
        $region73: #{tpu_custom_call.1} parent=71 // pred_check
          %p691 = pneg %p187
        $region74: #{tpu_custom_call.1} parent=71 // pred_check_branch
          %693 = sbr.rel (%p691) target = $region76
        $region75: #{tpu_custom_call.1} parent=71 // pred_region
          %s694 = sand.u32 %s172, 1
          %s695 = scalar_lea.sflag [#allocation4], %s694
          %s696 = sand.u32 %s172, 1
          %s697 = smul.addr %s696, 8
          %s698 = scalar_lea.vmem [#allocation11], %s697
          %699 = dma.done %s695, 128
        $region76: #{tpu_custom_call.1} parent=71 // pred_fallthru
          _
      $region72: #{tpu_custom_call.1} parent=5 // pred_fallthru
        _
    $region6: #{tpu_custom_call.1} parent=1 // loop_footer
      %s26 = sadd.s32 1, %s22
    $region7: #{tpu_custom_call.1} parent=1 // loop_footer_branch
      %21 = sbr.rel target = $region3
    $region8: #{tpu_custom_call.1} parent=1 // loop_exit
      _
    %700 = vsyncpa [#allocation3], 1
    %s701 = scalar_lea.sflag [#allocation3], 1
    %702 = vsyncpa %s701, 1
    %703 = vsyncpa [#allocation6], 1
    %s704 = scalar_lea.sflag [#allocation6], 1
    %705 = vsyncpa %s704, 1
    %706 = vsyncpa [#allocation9], 1
    %707 = vsyncpa [#allocation4], 1
    %s708 = scalar_lea.sflag [#allocation4], 1
    %709 = vsyncpa %s708, 1

</llo_original>
